<compile_context>
chip_gen: v7x
topology: tpu7x:2x2x1
jax: 0.10.0
libtpu: 0.0.40
codegen_flags: <defaults>
</compile_context>

<pallas_src>
import numpy as np
import jax
import jax.numpy as jnp
from jax.experimental import pallas as pl
from jax.experimental.pallas import tpu as pltpu


def _gfp_kernel(x_ref, w_ref, o_ref):
    # x_ref: (1, TB) lane-dense time steps
    # w_ref: (1, H)  raw gaussian weights (no pre-scaling)
    # o_ref: (TB, 2H)
    h = w_ref.shape[1]
    tb = x_ref.shape[1]
    # Lane -> sublane column relayout (XLU); hidden under the sin/cos work.
    x_col = x_ref[...].reshape(tb, 1)
    # Same multiply grouping as torch: ((x * W) * 2) * pi.
    x_proj = x_col * w_ref[...] * 2.0 * np.pi        # (TB, H) broadcast on VPU
    o_ref[:, :h] = jnp.sin(x_proj)
    o_ref[:, h:] = jnp.cos(x_proj)


def _round_up(n, m):
    return ((n + m - 1) // m) * m


def _choose_tile(B, tile_b):
    """Batch tile: full batch when tiny, else a multiple of 128 giving >=2 tiles."""
    if B <= 256:
        return B                       # single tile; block dim == full array dim
    tile_b = max(128, _round_up(tile_b, 128))
    half = _round_up(pl.cdiv(B, 2), 128)   # ensure >=2 grid steps (v7x megacore)
    return min(tile_b, half)


def gaussian_fourier_projection(x, W, *, tile_b=2048):
    """x: (B,) float, W: (H,) float  ->  (B, 2*H) float32.

    Matches GaussianFourierProjection.forward:
    concat([sin, cos], -1) of x[:, None] * W[None, :] * 2*pi.
    """
    B = x.shape[0]
    H = W.shape[0]

    TB = _choose_tile(B, tile_b)
    grid = (pl.cdiv(B, TB),)

    x2 = x.astype(jnp.float32).reshape(1, B)     # lane-dense input layout
    w2 = W.astype(jnp.float32).reshape(1, H)     # no per-call pre-scaling

    cost = pl.CostEstimate(
        flops=3 * B * H,                 # the broadcast multiplies
        transcendentals=2 * B * H,       # sin + cos
        bytes_accessed=4 * (B + H + B * 2 * H),
    )

    return pl.pallas_call(
        _gfp_kernel,
        out_shape=jax.ShapeDtypeStruct((B, 2 * H), jnp.float32),
        grid_spec=pl.GridSpec(
            grid=grid,
            in_specs=[
                pl.BlockSpec((1, TB), lambda i: (0, i)),     # batch tile of x
                pl.BlockSpec((1, H), lambda i: (0, 0)),      # W resident across tiles
            ],
            out_specs=pl.BlockSpec((TB, 2 * H), lambda i: (i, 0)),
        ),
        compiler_params=pltpu.CompilerParams(
            dimension_semantics=("parallel",),     # megacore split on v7x
            vmem_limit_bytes=32 * 1024 * 1024,     # headroom for tile_b=4096
        ),
        cost_estimate=cost,
    )(x2, w2)


def reference(x, W):
    # Same op order as the torch module: ((x * W) * 2) * pi, f32 throughout.
    x_proj = x[:, None].astype(jnp.float32) * W[None, :].astype(jnp.float32) \
        * 2.0 * np.pi
    return jnp.concatenate([jnp.sin(x_proj), jnp.cos(x_proj)], axis=-1)


if __name__ == "__main__":
    embed_dim = 256          # -> H = embed_dim // 2 = 128 (lane-aligned halves)
    scale = 30.0

    key = jax.random.PRNGKey(0)
    kw, kx1, kx2 = jax.random.split(key, 3)
    # Deterministic "parameter" init: randn(embed_dim // 2) * scale
    W = jax.random.normal(kw, (embed_dim // 2,), dtype=jnp.float32) * scale

    # Arguments reach |2*pi*W*x| ~ 7e2, so a few ulps of f32 range reduction in
    # sin/cos give ~1e-4 absolute wiggle; atol=5e-4 covers impl differences
    # between the Mosaic and XLA sin/cos while still catching real bugs.
    RTOL, ATOL = 1e-4, 5e-4

    # Small case: single tile (TB == B).
    batch = 8
    x = jax.random.uniform(kx1, (batch,), dtype=jnp.float32)
    out = jax.block_until_ready(gaussian_fourier_projection(x, W))
    np.testing.assert_allclose(np.asarray(out), np.asarray(reference(x, W)),
                               rtol=RTOL, atol=ATOL)
    assert out.shape == (batch, embed_dim)

    # Multi-tile case with a partial last tile (exercises the pipelined grid
    # and the >=2-step megacore split) at a small size.
    batch2 = 300
    x2 = jax.random.uniform(kx2, (batch2,), dtype=jnp.float32)
    out2 = jax.block_until_ready(
        gaussian_fourier_projection(x2, W, tile_b=128))
    np.testing.assert_allclose(np.asarray(out2), np.asarray(reference(x2, W)),
                               rtol=RTOL, atol=ATOL)
    assert out2.shape == (batch2, embed_dim)

    print("KERNEL_OK")
</pallas_src>

<mosaic_0001>
module attributes {stable_mosaic.version = 11 : i64} {
  func.func @_gfp_kernel(%arg0: i32, %arg1: memref<1x8xf32, #tpu.memory_space<vmem>>, %arg2: memref<1x128xf32, #tpu.memory_space<vmem>>, %arg3: memref<8x256xf32, #tpu.memory_space<vmem>>) attributes {dimension_semantics = [#tpu.dimension_semantics<parallel>], iteration_bounds = array<i64: 1>, scalar_prefetch = 0 : i64, scratch_operands = 0 : i64, tpu.core_type = #tpu.core_type<tc>, window_params = [{transform_indices = @transform_0, window_bounds = array<i64: 1, 8>}, {pipeline_mode = #tpu.pipeline_mode<synchronous>, transform_indices = @transform_1, window_bounds = array<i64: 1, 128>}, {transform_indices = @transform_2, window_bounds = array<i64: 8, 256>}]} {
    %c0 = arith.constant 0 : index
    %c0_0 = arith.constant 0 : index
    %0 = vector.load %arg1[%c0, %c0_0] : memref<1x8xf32, #tpu.memory_space<vmem>>, vector<1x8xf32>
    %1 = vector.shape_cast %0 : vector<1x8xf32> to vector<8x1xf32>
    %c0_1 = arith.constant 0 : index
    %c0_2 = arith.constant 0 : index
    %2 = vector.load %arg2[%c0_1, %c0_2] : memref<1x128xf32, #tpu.memory_space<vmem>>, vector<1x128xf32>
    %3 = vector.broadcast %1 : vector<8x1xf32> to vector<8x128xf32>
    %4 = vector.broadcast %2 : vector<1x128xf32> to vector<8x128xf32>
    %5 = arith.mulf %3, %4 : vector<8x128xf32>
    %cst = arith.constant 2.000000e+00 : f32
    %6 = vector.broadcast %cst : f32 to vector<8x128xf32>
    %7 = arith.mulf %5, %6 : vector<8x128xf32>
    %cst_3 = arith.constant 3.14159274 : f32
    %8 = vector.broadcast %cst_3 : f32 to vector<8x128xf32>
    %9 = arith.mulf %7, %8 : vector<8x128xf32>
    %10 = math.sin %9 : vector<8x128xf32>
    %c0_4 = arith.constant 0 : index
    %c0_5 = arith.constant 0 : index
    %11 = vector.load %arg3[%c0_4, %c0_5] : memref<8x256xf32, #tpu.memory_space<vmem>>, vector<8x128xf32>
    tpu.vector_store %arg3[%c0_4, %c0_5], %10 {strides = array<i32>} : memref<8x256xf32, #tpu.memory_space<vmem>>, vector<8x128xf32>,
    %12 = math.cos %9 : vector<8x128xf32>
    %c0_6 = arith.constant 0 : index
    %c128 = arith.constant 128 : index
    %13 = vector.load %arg3[%c0_6, %c128] : memref<8x256xf32, #tpu.memory_space<vmem>>, vector<8x128xf32>
    tpu.vector_store %arg3[%c0_6, %c128], %12 {strides = array<i32>} : memref<8x256xf32, #tpu.memory_space<vmem>>, vector<8x128xf32>,
    return
  }
  func.func @transform_0(%arg0: i32) -> (i32, i32) {
    %c0_i32 = arith.constant 0 : i32
    %c0_i32_0 = arith.constant 0 : i32
    return %c0_i32, %arg0 : i32, i32
  }
  func.func @transform_1(%arg0: i32) -> (i32, i32) {
    %c0_i32 = arith.constant 0 : i32
    %c0_i32_0 = arith.constant 0 : i32
    %c0_i32_1 = arith.constant 0 : i32
    return %c0_i32, %c0_i32_0 : i32, i32
  }
  func.func @transform_2(%arg0: i32) -> (i32, i32) {
    %c0_i32 = arith.constant 0 : i32
    %c0_i32_0 = arith.constant 0 : i32
    return %arg0, %c0_i32 : i32, i32
  }
}

</mosaic_0001>

<llo_original>
// kernel: tpu_custom_call.1
$region0: #{tpu_custom_call.1}
  #allocation0 [shape = 'u32[]', space=smem, size = 0x4, offset = 0x4, fixed_abs, tag = 'smem constant byte address 0x4 - core index']
  #allocation1 [shape = 'u32[144,128]{1,0:T(1,128)}', space=vmem, size = 0x12000, scoped, tag = 'internal scratch']
  %s0 = inlined_call_operand.hbm [shape: f32[1,8], index: 0, kind: input, shape index: {}]
  %s1 = inlined_call_operand.vmem [shape: f32[1,128], index: 1, kind: input, shape index: {}]
  %s2 = inlined_call_operand.hbm [shape: f32[8,256], index: 2, kind: output, shape index: {}]
  %s3 = sld [smem:[#allocation0]]
  $region22: #{tpu_custom_call.1} parent=0
    _
  %s5 = ssub.s32 1, %s3
  %s6 = scalar_select 0, %s5, %s3
  $region1: #{tpu_custom_call.1} parent=0
    #allocation2 [shape = 'u8[512]{0}', space=vmem, size = 0x400, scoped, tag = 'input window, operand 0, single buffered']
    #allocation3 [shape = 's32[1]{0}', space=sflag, size = 0x4, scoped, tag = 'scoped memory for tpu_custom_call.1']
    #allocation4 [shape = 's32[1]{0}', space=sflag, size = 0x4, scoped, tag = 'scoped memory for tpu_custom_call.1']
    #allocation5 [shape = 'u8[8192]{0}', space=vmem, size = 0x2000, scoped, tag = 'output window, operand 0, single buffered']
    %7 = vsyncpa [#allocation3], 0
    %8 = vsyncpa [#allocation4], 0
    // Predicated region
    $region2: #{tpu_custom_call.1} parent=1 // pred_check
      _
    $region3: #{tpu_custom_call.1} parent=1 // pred_check_branch
      %10 = sbr.rel (0) target = $region5
    $region4: #{tpu_custom_call.1} parent=1 // pred_region
      %s12 = ssub.s32 16, 16
      %13 = vsyncadd [#allocation3], %s12
      %s15 = sshll.u32 [#allocation2], 4
      %s16 = int_to_ptr.vmem [resolvable:$true] %s15
      %18 = dma.hbm_to_vmem [thread:$0]  %s0, 16, %s16, [#allocation3]
    $region5: #{tpu_custom_call.1} parent=1 // pred_fallthru
      _
    // Predicated region
    $region6: #{tpu_custom_call.1} parent=1 // pred_check
      _
    $region7: #{tpu_custom_call.1} parent=1 // pred_check_branch
      %20 = sbr.rel (0) target = $region9
    $region8: #{tpu_custom_call.1} parent=1 // pred_region
      _
    $region9: #{tpu_custom_call.1} parent=1 // pred_fallthru
      _
    // Predicated region
    $region10: #{tpu_custom_call.1} parent=1 // pred_check
      _
    $region11: #{tpu_custom_call.1} parent=1 // pred_check_branch
      %22 = sbr.rel (0) target = $region13
    $region12: #{tpu_custom_call.1} parent=1 // pred_region
      %23 = dma.done [#allocation3], 16
    $region13: #{tpu_custom_call.1} parent=1 // pred_fallthru
      _
    %v24 = vld [vmem:[#allocation2] sm:$0x1]
    %v25 = vlaneseq
    %v26 = vshrl.u32 %v25, 7
    %v27 = vsub.s32 0, %v26
    %v28 = vrot.slane %v24, %v27
    %30 = vbcast.lane.b32.xlu0 %v28, 256
    %v31 = vpop.permute.xlu0 %30
    %v32 = vld [vmem:[%s1] sm:$0x1]
    %v34 = vlaneseq
    %v35 = vshrl.u32 %v34, 7
    %v36 = vsub.s32 0, %v35
    %v37 = vrot.slane %v32, %v36
    %v39 = vmul.f32 %v31, %v37
    %v40 = vmul.f32 %v39, 2.0
    %v41 = vmul.f32 %v40, 3.1415927
    %v42 = vand.u32 2147483647, %v41
    %vm43 = vcmp.le.f32.partialorder %v42, 0.7853982
    %vm44 = vcmp.lt.s32.totalorder %v41, 0
    %v45 = vand.u32 %v41, 2139095040
    %v46 = vshrl.u32 %v45, 23
    %v47 = vsub.s32 %v46, 127
    %v48 = vand.u32 2147483647, %v41
    %v49 = vand.u32 %v48, 8388607
    %v50 = vor.u32 %v49, 8388608
    %v51 = vsub.s32 0, %v50
    %v52 = vadd.s32 %v47, 1
    %vm53 = vcmp.gt.s32.totalorder %v52, 0
    %v54 = vsel %vm53, %v52, 0
    %v55 = vshrl.u32 %v54, 5
    %v56 = vand.u32 %v54, 31
    %v57 = vsub.s32 32, %v56
    %v58 = vshrl.u32 683565275, %v57
    %v59 = vshll.u32 683565275, %v56
    %v60 = vshrl.u32 2475754826, %v57
    %v61 = vor.u32 %v59, %v60
    %v62 = vshll.u32 2475754826, %v56
    %v63 = vshrl.u32 2131351028, %v57
    %v64 = vor.u32 %v62, %v63
    %v65 = vshll.u32 2131351028, %v56
    %v66 = vshrl.u32 2102212464, %v57
    %v67 = vor.u32 %v65, %v66
    %v68 = vshll.u32 2102212464, %v56
    %v69 = vshrl.u32 920167782, %v57
    %v70 = vor.u32 %v68, %v69
    %v71 = vshll.u32 920167782, %v56
    %v72 = vshrl.u32 1326507024, %v57
    %v73 = vor.u32 %v71, %v72
    %vm74 = vcmp.lt.s32.totalorder %v55, 1
    %vm75 = vcmp.lt.s32.totalorder %v55, 2
    %vm76 = vcmp.lt.s32.totalorder %v55, 3
    %vm77 = vcmp.lt.s32.totalorder %v55, 4
    %v78 = vsel %vm74, %v58, %v61
    %v79 = vsel %vm77, %v67, 2102212464
    %v80 = vsel %vm76, %v64, %v79
    %v81 = vsel %vm75, %v78, %v80
    %v82 = vsel %vm74, %v61, %v64
    %v83 = vsel %vm77, %v70, 920167782
    %v84 = vsel %vm76, %v67, %v83
    %v85 = vsel %vm75, %v82, %v84
    %v86 = vsel %vm74, %v64, %v67
    %v87 = vsel %vm77, %v73, 1326507024
    %v88 = vsel %vm76, %v70, %v87
    %v89 = vsel %vm75, %v86, %v88
    %v90 = vshll.u32 %v50, 8
    %v91 = vmul.u32.u64.compose %v90, %v89
    %v92 = vextract.low.u32 %v91
    %v93 = vextract.high.u32 %v91
    %v94 = vmul.u32.u64.compose %v90, %v85
    %v95 = vextract.low.u32 %v94
    %v96 = vextract.high.u32 %v94
    %v97 = vmul.u32 %v90, %v81
    %v98 = vadd.s32 %v93, %v95
    %vm99 = vc.u32 %v93, %v95
    %v100 = vadd.s32 %v96, 1
    %v101 = vsel %vm99, %v100, %v96
    %v102 = vadd.s32 %v97, %v101
    %v103 = vadd.s32 %v102, 536870912
    %v104 = vshrl.u32 %v103, 30
    %v105 = vshll.u32 %v104, 30
    %v106 = vsub.s32 %v102, %v105
    %vm107 = vcmp.lt.s32.totalorder %v106, 0
    %v108 = vsub.s32 0, %v106
    %v109 = vsel %vm107, %v108, %v106
    %v110 = vclz %v109
    %v111 = vsub.s32 %v110, 2
    %vm112 = vcmp.gt.s32.totalorder 0, %v111
    %v113 = vsel %vm112, 0, %v111
    %v114 = vsub.s32 32, %v113
    %v115 = vshll.u32 %v106, %v113
    %v116 = vshrl.u32 %v98, %v114
    %v117 = vor.u32 %v115, %v116
    %v118 = vsub.s32 4294967266, %v113
    %v119 = vadd.s32 %v118, 127
    %v120 = vshll.u32 %v119, 23
    %v121 = vor.u32 4788187, %v120
    %v122 = vand.u32 2147483647, %v121
    %v124 = vcvt.s32.f32 %v117
    %v125 = vmul.f32 %v124, %v122
    %v126 = vxor.u32 %v125, 2147483648
    %v127 = vsel %vm44, %v126, %v125
    %v128 = vsub.s32 4, %v104
    %v129 = vsel %vm44, %v128, %v104
    %v130 = vsel %vm43, %v41, %v127
    %v131 = vsel %vm43, 0, %v129
    %v132 = vcosq.f32.pop %v130
    %v133 = vsinq.f32.pop %v130
    %vm134 = vweird.f32 %v41
    %v135 = vadd.s32 %v131, 3
    %v136 = vand.u32 %v135, 3
    %vm137 = vcmp.lt.s32.totalorder %v136, 2
    %vm138 = vcmp.eq.s32.totalorder %v136, 0
    %v139 = vxor.u32 %v133, 2147483648
    %v140 = vsel %vm138, %v132, %v139
    %vm141 = vcmp.eq.s32.totalorder %v136, 2
    %v142 = vxor.u32 %v132, 2147483648
    %v143 = vsel %vm141, %v142, %v133
    %v144 = vsel %vm137, %v140, %v143
    %v145 = vsel %vm134, nan, %v144
    %146 = vst [vmem:[#allocation5] sm:$0xff] %v145
    %v147 = vand.u32 2147483647, %v41
    %vm148 = vcmp.le.f32.partialorder %v147, 0.7853982
    %vm149 = vcmp.lt.s32.totalorder %v41, 0
    %v150 = vand.u32 %v41, 2139095040
    %v151 = vshrl.u32 %v150, 23
    %v152 = vsub.s32 %v151, 127
    %v153 = vand.u32 2147483647, %v41
    %v154 = vand.u32 %v153, 8388607
    %v155 = vor.u32 %v154, 8388608
    %v156 = vsub.s32 0, %v155
    %v157 = vadd.s32 %v152, 1
    %vm158 = vcmp.gt.s32.totalorder %v157, 0
    %v159 = vsel %vm158, %v157, 0
    %v160 = vshrl.u32 %v159, 5
    %v161 = vand.u32 %v159, 31
    %v162 = vsub.s32 32, %v161
    %v163 = vshrl.u32 683565275, %v162
    %v164 = vshll.u32 683565275, %v161
    %v165 = vshrl.u32 2475754826, %v162
    %v166 = vor.u32 %v164, %v165
    %v167 = vshll.u32 2475754826, %v161
    %v168 = vshrl.u32 2131351028, %v162
    %v169 = vor.u32 %v167, %v168
    %v170 = vshll.u32 2131351028, %v161
    %v171 = vshrl.u32 2102212464, %v162
    %v172 = vor.u32 %v170, %v171
    %v173 = vshll.u32 2102212464, %v161
    %v174 = vshrl.u32 920167782, %v162
    %v175 = vor.u32 %v173, %v174
    %v176 = vshll.u32 920167782, %v161
    %v177 = vshrl.u32 1326507024, %v162
    %v178 = vor.u32 %v176, %v177
    %vm179 = vcmp.lt.s32.totalorder %v160, 1
    %vm180 = vcmp.lt.s32.totalorder %v160, 2
    %vm181 = vcmp.lt.s32.totalorder %v160, 3
    %vm182 = vcmp.lt.s32.totalorder %v160, 4
    %v183 = vsel %vm179, %v163, %v166
    %v184 = vsel %vm182, %v172, 2102212464
    %v185 = vsel %vm181, %v169, %v184
    %v186 = vsel %vm180, %v183, %v185
    %v187 = vsel %vm179, %v166, %v169
    %v188 = vsel %vm182, %v175, 920167782
    %v189 = vsel %vm181, %v172, %v188
    %v190 = vsel %vm180, %v187, %v189
    %v191 = vsel %vm179, %v169, %v172
    %v192 = vsel %vm182, %v178, 1326507024
    %v193 = vsel %vm181, %v175, %v192
    %v194 = vsel %vm180, %v191, %v193
    %v195 = vshll.u32 %v155, 8
    %v196 = vmul.u32.u64.compose %v195, %v194
    %v197 = vextract.low.u32 %v196
    %v198 = vextract.high.u32 %v196
    %v199 = vmul.u32.u64.compose %v195, %v190
    %v200 = vextract.low.u32 %v199
    %v201 = vextract.high.u32 %v199
    %v202 = vmul.u32 %v195, %v186
    %v203 = vadd.s32 %v198, %v200
    %vm204 = vc.u32 %v198, %v200
    %v205 = vadd.s32 %v201, 1
    %v206 = vsel %vm204, %v205, %v201
    %v207 = vadd.s32 %v202, %v206
    %v208 = vadd.s32 %v207, 536870912
    %v209 = vshrl.u32 %v208, 30
    %v210 = vshll.u32 %v209, 30
    %v211 = vsub.s32 %v207, %v210
    %vm212 = vcmp.lt.s32.totalorder %v211, 0
    %v213 = vsub.s32 0, %v211
    %v214 = vsel %vm212, %v213, %v211
    %v215 = vclz %v214
    %v216 = vsub.s32 %v215, 2
    %vm217 = vcmp.gt.s32.totalorder 0, %v216
    %v218 = vsel %vm217, 0, %v216
    %v219 = vsub.s32 32, %v218
    %v220 = vshll.u32 %v211, %v218
    %v221 = vshrl.u32 %v203, %v219
    %v222 = vor.u32 %v220, %v221
    %v223 = vsub.s32 4294967266, %v218
    %v224 = vadd.s32 %v223, 127
    %v225 = vshll.u32 %v224, 23
    %v226 = vor.u32 4788187, %v225
    %v227 = vand.u32 2147483647, %v226
    %v229 = vcvt.s32.f32 %v222
    %v230 = vmul.f32 %v229, %v227
    %v231 = vxor.u32 %v230, 2147483648
    %v232 = vsel %vm149, %v231, %v230
    %v233 = vsub.s32 4, %v209
    %v234 = vsel %vm149, %v233, %v209
    %v235 = vsel %vm148, %v41, %v232
    %v236 = vsel %vm148, 0, %v234
    %v237 = vcosq.f32.pop %v235
    %v238 = vsinq.f32.pop %v235
    %vm239 = vweird.f32 %v41
    %v240 = vand.u32 %v236, 3
    %vm241 = vcmp.lt.s32.totalorder %v240, 2
    %vm242 = vcmp.eq.s32.totalorder %v240, 0
    %v243 = vxor.u32 %v238, 2147483648
    %v244 = vsel %vm242, %v237, %v243
    %vm245 = vcmp.eq.s32.totalorder %v240, 2
    %v246 = vxor.u32 %v237, 2147483648
    %v247 = vsel %vm245, %v246, %v238
    %v248 = vsel %vm241, %v244, %v247
    %v249 = vsel %vm239, nan, %v248
    %250 = vst [vmem:[#allocation5 + $0x8] sm:$0xff] %v249
    // Predicated region
    $region14: #{tpu_custom_call.1} parent=1 // pred_check
      _
    $region15: #{tpu_custom_call.1} parent=1 // pred_check_branch
      %252 = sbr.rel (0) target = $region17
    $region16: #{tpu_custom_call.1} parent=1 // pred_region
      %s254 = ssub.s32 256, 256
      %255 = vsyncadd [#allocation4], %s254
      %s257 = sshll.u32 [#allocation5], 4
      %s258 = int_to_ptr.vmem [resolvable:$true] %s257
      %260 = dma.vmem_to_hbm [thread:$0]  %s258, 256, %s2, [#allocation4]
    $region17: #{tpu_custom_call.1} parent=1 // pred_fallthru
      _
    // Predicated region
    $region18: #{tpu_custom_call.1} parent=1 // pred_check
      _
    $region19: #{tpu_custom_call.1} parent=1 // pred_check_branch
      %262 = sbr.rel (0) target = $region21
    $region20: #{tpu_custom_call.1} parent=1 // pred_region
      %263 = dma.done [#allocation4], 256
    $region21: #{tpu_custom_call.1} parent=1 // pred_fallthru
      _
    %264 = vsyncpa [#allocation3], 1
    %265 = vsyncpa [#allocation4], 1

</llo_original>
